<compile_context>
chip_gen: v6e
topology: v6e:2x2x1
jax: 0.10.0
libtpu: 0.0.40
codegen_flags: <defaults>
</compile_context>

<pallas_src>
import jax
import jax.numpy as jnp
from jax.experimental import pallas as pl
from jax.experimental.pallas import tpu as pltpu


def _round_up(x, m):
    return ((x + m - 1) // m) * m


def _packed_dims(N, S, A, D, H):
    """Column layout of the two packed (block-diagonal) weight matrices."""
    off_sc = _round_up(N * H, 128)          # per-agent scaling hidden units
    one_col = off_sc + N                    # constant-1 hidden unit (bias fold)
    off_con = _round_up(one_col + 1, 128)   # per-agent constraint hidden blocks
    C1 = _round_up(off_con + N * D, 128)    # fused hidden width (lane padded)

    off_s = N * A                           # scale logits in z
    off_c = off_s + N                       # (pre-averaged) constraint column
    C2 = _round_up(off_c + 1, 128)          # fused output width (lane padded)
    return off_sc, one_col, off_con, C1, off_s, off_c, C2


# --------------------------------------------------------------------------
# Kernel: N tiny per-agent matmuls (fused layer 1) + fused layer 2 + a
# lane-dense MXU/EUP epilogue (sigmoid-scaled agent mean + constraint add).
# --------------------------------------------------------------------------
def _make_kernel(n_agents):
    N = n_agents

    def kernel(x_ref, w1_ref, b1_ref, w2_ref, e_ref, qm_ref, cm_ref, r_ref,
               out_ref):
        # x_ref: [N, bb, S] (native layout, no host transpose)
        # w1_ref: [N, S, C1] per-agent slabs of the block-diagonal fused W1.
        h = jnp.dot(x_ref[0], w1_ref[0], preferred_element_type=jnp.float32)
        for n in range(1, N):                       # static unroll, N is tiny
            h = h + jnp.dot(x_ref[n], w1_ref[n],
                            preferred_element_type=jnp.float32)
        h = jnp.maximum(h + b1_ref[...], 0.0)                    # [bb, C1]

        # Fused layer 2 (per-agent DQN L2, scaling L2, pre-averaged constraint
        # L2; all layer-2 biases folded in via the constant-1 hidden unit).
        z = jnp.dot(h, w2_ref[...], preferred_element_type=jnp.float32)  # [bb, C2]

        # z column layout: [0,N*A) q-values | [N*A,N*A+N) scale logits |
        # N*A+N constraint (already averaged over agents) | padding.
        #
        # The attention block of the original module is a mathematical no-op
        # (softmax row sums == 1), so weighted_qs == q_values here.
        #
        # Lane-dense combine:
        #   s = sigmoid(z @ E)  broadcasts each agent's scale logit over its
        #       A q-value lanes (E is a 0/1 select matrix).
        #   w = (s*qmask + cmask) * z   keeps sigmoid-scaled q lanes and
        #       passes the constraint lane through unscaled.
        #   out = w @ R          folds the 1/N agent mean and the constraint
        #       broadcast into one tiny MXU matmul.
        s = jax.nn.sigmoid(jnp.dot(z, e_ref[...],
                                   preferred_element_type=jnp.float32))
        w = (s * qm_ref[...] + cm_ref[...]) * z                   # [bb, C2]
        out_ref[...] = jnp.dot(w, r_ref[...],
                               preferred_element_type=jnp.float32)

    return kernel


# --------------------------------------------------------------------------
# Host-side packing of the module parameters into the fused operands.
# --------------------------------------------------------------------------
def pack_params(params, N, S, A, D, H):
    (dqn_w1, dqn_b1, dqn_w2, dqn_b2,
     _q_w1, _q_b1, _q_w2, _q_b2,      # query layers: dead compute (softmax
     _k_w, _k_b,                      # key layers:   row sums == 1), unused
     s_w1, s_b1, s_w2, s_b2,
     c_w1, c_b1, c_w2, c_b2) = params

    off_sc, one_col, off_con, C1, off_s, off_c, C2 = _packed_dims(N, S, A, D, H)

    W1 = jnp.zeros((N, S, C1), jnp.float32)   # per-agent slabs (block diag)
    b1 = jnp.zeros((1, C1), jnp.float32)
    W2 = jnp.zeros((C1, C2), jnp.float32)

    for n in range(N):
        # ---- layer 1: agent-n slab (only agent n's state feeds these cols) --
        W1 = W1.at[n, :, n * H:(n + 1) * H].set(dqn_w1[n])
        W1 = W1.at[n, :, off_sc + n].set(s_w1[0])                    # shared
        W1 = W1.at[n, :, off_con + n * D: off_con + (n + 1) * D].set(c_w1)

        b1 = b1.at[0, n * H:(n + 1) * H].set(dqn_b1[n])
        b1 = b1.at[0, off_sc + n].set(s_b1[0, 0])
        b1 = b1.at[0, off_con + n * D: off_con + (n + 1) * D].set(c_b1[0])

        # ---- layer 2 ----
        W2 = W2.at[n * H:(n + 1) * H, n * A:(n + 1) * A].set(dqn_w2[n])
        W2 = W2.at[off_sc + n, off_s + n].set(s_w2[0, 0])
        # constraint L2: fold the 1/N agent mean and route every agent into
        # the same output column.
        W2 = W2.at[off_con + n * D: off_con + (n + 1) * D, off_c].set(
            c_w2[0] / N)

        # layer-2 biases, folded through the constant-1 hidden unit
        W2 = W2.at[one_col, n * A:(n + 1) * A].set(dqn_b2[n])
        W2 = W2.at[one_col, off_s + n].set(s_b2[0, 0])

    b1 = b1.at[0, one_col].set(1.0)              # relu(0*x + 1) == 1
    W2 = W2.at[one_col, off_c].set(c_b2[0, 0])   # mean of N equal biases

    # ---- epilogue constants (lane-dense combine) ----
    E = jnp.zeros((C2, C2), jnp.float32)         # scale-logit -> q-lane select
    R = jnp.zeros((C2, A), jnp.float32)          # agent-mean + constraint add
    eyeA = jnp.eye(A, dtype=jnp.float32)
    for n in range(N):
        E = E.at[off_s + n, n * A:(n + 1) * A].set(1.0)
        R = R.at[n * A:(n + 1) * A, :].set(eyeA / N)
    R = R.at[off_c, :].set(1.0)                  # broadcast constraint over A

    qmask = jnp.zeros((1, C2), jnp.float32).at[0, :N * A].set(1.0)
    cmask = jnp.zeros((1, C2), jnp.float32).at[0, off_c].set(1.0)

    return W1, b1, W2, E, qmask, cmask, R, (C1, C2)


def _pick_batch_tile(B):
    """Batch rows per grid step.

    <= 1024 rows keeps the block (+double buffering + intermediates) under
    ~9 MiB of VMEM, safely inside every generation's scoped default.  Batches
    with >= 256 rows are split into at least two blocks so the "parallel"
    grid axis can shard across v7x's two TensorCores.
    """
    BB_MAX = 1024
    if B > BB_MAX:
        return BB_MAX
    if B >= 256:
        return min(B, _round_up((B + 1) // 2, 8))
    return B


# --------------------------------------------------------------------------
# Wrapper.
# --------------------------------------------------------------------------
def qatten_forward(states, params):
    """states: [num_agents, batch, state_dim] float32."""
    N, B, S = states.shape
    H = params[0].shape[2]            # dqn_w1 [N, S, H]
    A = params[2].shape[2]            # dqn_w2 [N, H, A]
    D = params[14].shape[1]           # c_w1   [S, D]

    W1, b1, W2, E, qmask, cmask, R, (C1, C2) = pack_params(params, N, S, A, D, H)

    if states.dtype != jnp.float32:
        states = states.astype(jnp.float32)

    bb = _pick_batch_tile(B)
    grid = (pl.cdiv(B, bb),)          # ragged tail handled by Pallas masking

    kernel = _make_kernel(N)

    return pl.pallas_call(
        kernel,
        out_shape=jax.ShapeDtypeStruct((B, A), jnp.float32),
        grid=grid,
        in_specs=[
            # streamed operand, native (N, B, S) layout -> no host transpose
            pl.BlockSpec((N, bb, S), lambda i: (0, i, 0)),
            # resident packed weights / constants (constant block indices)
            pl.BlockSpec((N, S, C1), lambda i: (0, 0, 0)),
            pl.BlockSpec((1, C1), lambda i: (0, 0)),
            pl.BlockSpec((C1, C2), lambda i: (0, 0)),
            pl.BlockSpec((C2, C2), lambda i: (0, 0)),
            pl.BlockSpec((1, C2), lambda i: (0, 0)),
            pl.BlockSpec((1, C2), lambda i: (0, 0)),
            pl.BlockSpec((C2, A), lambda i: (0, 0)),
        ],
        out_specs=pl.BlockSpec((bb, A), lambda i: (i, 0)),
        compiler_params=pltpu.CompilerParams(
            dimension_semantics=("parallel",),
            vmem_limit_bytes=32 * 1024 * 1024),
    )(states, W1, b1, W2, E, qmask, cmask, R)


# --------------------------------------------------------------------------
# Pure-JAX reference mirroring the PyTorch forward exactly (including the
# attention path, to verify that removing it from the kernel is a no-op).
# --------------------------------------------------------------------------
def qatten_reference(states, params):
    (dqn_w1, dqn_b1, dqn_w2, dqn_b2,
     q_w1, q_b1, q_w2, q_b2,
     k_w, k_b,
     s_w1, s_b1, s_w2, s_b2,
     c_w1, c_b1, c_w2, c_b2) = params
    relu = lambda x: jnp.maximum(x, 0.0)
    D = k_w.shape[2]

    h = relu(jnp.einsum('nbs,nsh->nbh', states, dqn_w1) + dqn_b1[:, None, :])
    q_values = jnp.einsum('nbh,nha->nba', h, dqn_w2) + dqn_b2[:, None, :]
    q_values = jnp.transpose(q_values, (1, 0, 2))                     # [B,N,A]

    keys = jnp.einsum('nbs,nsd->nbd', states, k_w) + k_b[:, None, :]
    keys = jnp.transpose(keys, (1, 0, 2))                             # [B,N,D]

    hq = relu(jnp.einsum('nbs,nsd->nbd', states, q_w1) + q_b1[:, None, :])
    queries = jnp.einsum('nbd,nde->nbe', hq, q_w2) + q_b2[:, None, :]
    queries = jnp.transpose(queries, (1, 0, 2))                       # [B,N,D]

    scores = jnp.einsum('bnd,bmd->bnm', queries, keys) / (D ** 0.5)
    attn = jax.nn.softmax(scores, axis=-1)
    weighted_qs = jnp.einsum('bnm,bna->bna', attn, q_values)

    h1 = relu(jnp.einsum('nbs,os->nbo', states, s_w1) + s_b1[0, 0])
    scal = jax.nn.sigmoid(h1 * s_w2[0, 0] + s_b2[0, 0])               # [N,B,1]
    scal = jnp.transpose(scal, (1, 0, 2))                             # [B,N,1]

    scaled = scal * weighted_qs
    summed = jnp.mean(scaled, axis=1)                                 # [B, A]

    hc = relu(jnp.einsum('nbs,sd->nbd', states, c_w1) + c_b1)
    c = jnp.einsum('nbd,od->nbo', hc, c_w2) + c_b2[0, 0]              # [N,B,1]
    c = jnp.mean(jnp.transpose(c, (1, 0, 2)), axis=1)                 # [B, 1]

    return summed + c


def init_params(key, N, S, A, D, H):
    ks = jax.random.split(key, 18)

    def w(k, shape, scale=0.1):
        return jax.random.normal(k, shape, jnp.float32) * scale

    dqn_w1 = w(ks[0], (N, S, H)); dqn_b1 = w(ks[1], (N, H))
    dqn_w2 = w(ks[2], (N, H, A)); dqn_b2 = w(ks[3], (N, A))
    q_w1 = w(ks[4], (N, S, D));   q_b1 = w(ks[5], (N, D))
    q_w2 = w(ks[6], (N, D, D));   q_b2 = w(ks[7], (N, D))
    k_w = w(ks[8], (N, S, D));    k_b = w(ks[9], (N, D))
    s_w1 = w(ks[10], (1, S));     s_b1 = w(ks[11], (1, 1))
    s_w2 = w(ks[12], (1, 1));     s_b2 = w(ks[13], (1, 1))
    c_w1 = w(ks[14], (S, D));     c_b1 = w(ks[15], (1, D))
    c_w2 = w(ks[16], (1, D));     c_b2 = w(ks[17], (1, 1))
    return (dqn_w1, dqn_b1, dqn_w2, dqn_b2, q_w1, q_b1, q_w2, q_b2,
            k_w, k_b, s_w1, s_b1, s_w2, s_b2, c_w1, c_b1, c_w2, c_b2)


if __name__ == "__main__":
    key = jax.random.PRNGKey(0)
    k_states, k_params = jax.random.split(key)

    # num_agents=4, batch=8, state_dim=16, action_dim=8, attention_dim=32, H=32
    N, B, S, A, D, H = 4, 8, 16, 8, 32, 32

    states = jax.random.normal(k_states, (N, B, S), jnp.float32)
    params = init_params(k_params, N, S, A, D, H)

    out = jax.block_until_ready(qatten_forward(states, params))

    ref = qatten_reference(states, params)
    assert out.shape == (B, A)
    assert bool(jnp.all(jnp.isfinite(out)))
    max_diff = float(jnp.max(jnp.abs(out - ref)))
    if not jnp.allclose(out, ref, atol=1e-3, rtol=1e-3):
        raise AssertionError(f"kernel/reference mismatch: max abs diff {max_diff}")
    print("KERNEL_OK")
</pallas_src>

<mosaic_0001>
module attributes {stable_mosaic.version = 11 : i64} {
  func.func @kernel(%arg0: i32, %arg1: memref<4x8x16xf32, #tpu.memory_space<vmem>>, %arg2: memref<4x16x384xf32, #tpu.memory_space<vmem>>, %arg3: memref<1x384xf32, #tpu.memory_space<vmem>>, %arg4: memref<384x128xf32, #tpu.memory_space<vmem>>, %arg5: memref<128x128xf32, #tpu.memory_space<vmem>>, %arg6: memref<1x128xf32, #tpu.memory_space<vmem>>, %arg7: memref<1x128xf32, #tpu.memory_space<vmem>>, %arg8: memref<128x8xf32, #tpu.memory_space<vmem>>, %arg9: memref<8x8xf32, #tpu.memory_space<vmem>>) attributes {dimension_semantics = [#tpu.dimension_semantics<parallel>], iteration_bounds = array<i64: 1>, scalar_prefetch = 0 : i64, scratch_operands = 0 : i64, tpu.core_type = #tpu.core_type<tc>, window_params = [{transform_indices = @transform_0, window_bounds = array<i64: 4, 8, 16>}, {pipeline_mode = #tpu.pipeline_mode<synchronous>, transform_indices = @transform_1, window_bounds = array<i64: 4, 16, 384>}, {pipeline_mode = #tpu.pipeline_mode<synchronous>, transform_indices = @transform_2, window_bounds = array<i64: 1, 384>}, {pipeline_mode = #tpu.pipeline_mode<synchronous>, transform_indices = @transform_3, window_bounds = array<i64: 384, 128>}, {pipeline_mode = #tpu.pipeline_mode<synchronous>, transform_indices = @transform_4, window_bounds = array<i64: 128, 128>}, {pipeline_mode = #tpu.pipeline_mode<synchronous>, transform_indices = @transform_5, window_bounds = array<i64: 1, 128>}, {pipeline_mode = #tpu.pipeline_mode<synchronous>, transform_indices = @transform_6, window_bounds = array<i64: 1, 128>}, {pipeline_mode = #tpu.pipeline_mode<synchronous>, transform_indices = @transform_7, window_bounds = array<i64: 128, 8>}, {transform_indices = @transform_8, window_bounds = array<i64: 8, 8>}]} {
    %c0 = arith.constant 0 : index
    %c0_0 = arith.constant 0 : index
    %c0_1 = arith.constant 0 : index
    %0 = vector.load %arg1[%c0, %c0_0, %c0_1] : memref<4x8x16xf32, #tpu.memory_space<vmem>>, vector<1x8x16xf32>
    %1 = vector.shape_cast %0 : vector<1x8x16xf32> to vector<8x16xf32>
    %c0_2 = arith.constant 0 : index
    %c0_3 = arith.constant 0 : index
    %c0_4 = arith.constant 0 : index
    %2 = vector.load %arg2[%c0_2, %c0_3, %c0_4] : memref<4x16x384xf32, #tpu.memory_space<vmem>>, vector<1x16x384xf32>
    %3 = vector.shape_cast %2 : vector<1x16x384xf32> to vector<16x384xf32>
    %cst = arith.constant dense<0.000000e+00> : vector<8x384xf32>
    %4 = tpu.matmul %1, %3, %cst {dimension_numbers = #tpu.dot_dimension_numbers<[1], [0], [0], [1], [0, 0, 1, 1], [], []>} : vector<8x16xf32>, vector<16x384xf32>, vector<8x384xf32> -> vector<8x384xf32>
    %c1 = arith.constant 1 : index
    %c0_5 = arith.constant 0 : index
    %c0_6 = arith.constant 0 : index
    %5 = vector.load %arg1[%c1, %c0_5, %c0_6] : memref<4x8x16xf32, #tpu.memory_space<vmem>>, vector<1x8x16xf32>
    %6 = vector.shape_cast %5 : vector<1x8x16xf32> to vector<8x16xf32>
    %c1_7 = arith.constant 1 : index
    %c0_8 = arith.constant 0 : index
    %c0_9 = arith.constant 0 : index
    %7 = vector.load %arg2[%c1_7, %c0_8, %c0_9] : memref<4x16x384xf32, #tpu.memory_space<vmem>>, vector<1x16x384xf32>
    %8 = vector.shape_cast %7 : vector<1x16x384xf32> to vector<16x384xf32>
    %cst_10 = arith.constant dense<0.000000e+00> : vector<8x384xf32>
    %9 = tpu.matmul %6, %8, %cst_10 {dimension_numbers = #tpu.dot_dimension_numbers<[1], [0], [0], [1], [0, 0, 1, 1], [], []>} : vector<8x16xf32>, vector<16x384xf32>, vector<8x384xf32> -> vector<8x384xf32>
    %10 = arith.addf %4, %9 : vector<8x384xf32>
    %c2 = arith.constant 2 : index
    %c0_11 = arith.constant 0 : index
    %c0_12 = arith.constant 0 : index
    %11 = vector.load %arg1[%c2, %c0_11, %c0_12] : memref<4x8x16xf32, #tpu.memory_space<vmem>>, vector<1x8x16xf32>
    %12 = vector.shape_cast %11 : vector<1x8x16xf32> to vector<8x16xf32>
    %c2_13 = arith.constant 2 : index
    %c0_14 = arith.constant 0 : index
    %c0_15 = arith.constant 0 : index
    %13 = vector.load %arg2[%c2_13, %c0_14, %c0_15] : memref<4x16x384xf32, #tpu.memory_space<vmem>>, vector<1x16x384xf32>
    %14 = vector.shape_cast %13 : vector<1x16x384xf32> to vector<16x384xf32>
    %cst_16 = arith.constant dense<0.000000e+00> : vector<8x384xf32>
    %15 = tpu.matmul %12, %14, %cst_16 {dimension_numbers = #tpu.dot_dimension_numbers<[1], [0], [0], [1], [0, 0, 1, 1], [], []>} : vector<8x16xf32>, vector<16x384xf32>, vector<8x384xf32> -> vector<8x384xf32>
    %16 = arith.addf %10, %15 : vector<8x384xf32>
    %c3 = arith.constant 3 : index
    %c0_17 = arith.constant 0 : index
    %c0_18 = arith.constant 0 : index
    %17 = vector.load %arg1[%c3, %c0_17, %c0_18] : memref<4x8x16xf32, #tpu.memory_space<vmem>>, vector<1x8x16xf32>
    %18 = vector.shape_cast %17 : vector<1x8x16xf32> to vector<8x16xf32>
    %c3_19 = arith.constant 3 : index
    %c0_20 = arith.constant 0 : index
    %c0_21 = arith.constant 0 : index
    %19 = vector.load %arg2[%c3_19, %c0_20, %c0_21] : memref<4x16x384xf32, #tpu.memory_space<vmem>>, vector<1x16x384xf32>
    %20 = vector.shape_cast %19 : vector<1x16x384xf32> to vector<16x384xf32>
    %cst_22 = arith.constant dense<0.000000e+00> : vector<8x384xf32>
    %21 = tpu.matmul %18, %20, %cst_22 {dimension_numbers = #tpu.dot_dimension_numbers<[1], [0], [0], [1], [0, 0, 1, 1], [], []>} : vector<8x16xf32>, vector<16x384xf32>, vector<8x384xf32> -> vector<8x384xf32>
    %22 = arith.addf %16, %21 : vector<8x384xf32>
    %c0_23 = arith.constant 0 : index
    %c0_24 = arith.constant 0 : index
    %23 = vector.load %arg3[%c0_23, %c0_24] : memref<1x384xf32, #tpu.memory_space<vmem>>, vector<1x384xf32>
    %24 = vector.broadcast %23 : vector<1x384xf32> to vector<8x384xf32>
    %25 = arith.addf %22, %24 : vector<8x384xf32>
    %cst_25 = arith.constant 0.000000e+00 : f32
    %26 = vector.broadcast %cst_25 : f32 to vector<8x384xf32>
    %27 = arith.maximumf %25, %26 : vector<8x384xf32>
    %c0_26 = arith.constant 0 : index
    %c0_27 = arith.constant 0 : index
    %28 = vector.load %arg4[%c0_26, %c0_27] : memref<384x128xf32, #tpu.memory_space<vmem>>, vector<384x128xf32>
    %cst_28 = arith.constant dense<0.000000e+00> : vector<8x128xf32>
    %29 = tpu.matmul %27, %28, %cst_28 {dimension_numbers = #tpu.dot_dimension_numbers<[1], [0], [0], [1], [0, 0, 1, 1], [], []>} : vector<8x384xf32>, vector<384x128xf32>, vector<8x128xf32> -> vector<8x128xf32>
    %c0_29 = arith.constant 0 : index
    %c0_30 = arith.constant 0 : index
    %30 = vector.load %arg5[%c0_29, %c0_30] : memref<128x128xf32, #tpu.memory_space<vmem>>, vector<128x128xf32>
    %cst_31 = arith.constant dense<0.000000e+00> : vector<8x128xf32>
    %31 = tpu.matmul %29, %30, %cst_31 {dimension_numbers = #tpu.dot_dimension_numbers<[1], [0], [0], [1], [0, 0, 1, 1], [], []>} : vector<8x128xf32>, vector<128x128xf32>, vector<8x128xf32> -> vector<8x128xf32>
    %32 = arith.negf %31 : vector<8x128xf32>
    %33 = math.exp %32 : vector<8x128xf32>
    %cst_32 = arith.constant 1.000000e+00 : f32
    %34 = vector.broadcast %cst_32 : f32 to vector<8x128xf32>
    %35 = arith.addf %34, %33 : vector<8x128xf32>
    %36 = arith.divf %34, %35 : vector<8x128xf32>
    %c0_33 = arith.constant 0 : index
    %c0_34 = arith.constant 0 : index
    %37 = vector.load %arg6[%c0_33, %c0_34] : memref<1x128xf32, #tpu.memory_space<vmem>>, vector<1x128xf32>
    %38 = vector.broadcast %37 : vector<1x128xf32> to vector<8x128xf32>
    %39 = arith.mulf %36, %38 : vector<8x128xf32>
    %c0_35 = arith.constant 0 : index
    %c0_36 = arith.constant 0 : index
    %40 = vector.load %arg7[%c0_35, %c0_36] : memref<1x128xf32, #tpu.memory_space<vmem>>, vector<1x128xf32>
    %41 = vector.broadcast %40 : vector<1x128xf32> to vector<8x128xf32>
    %42 = arith.addf %39, %41 : vector<8x128xf32>
    %43 = arith.mulf %42, %29 : vector<8x128xf32>
    %c0_37 = arith.constant 0 : index
    %c0_38 = arith.constant 0 : index
    %44 = vector.load %arg8[%c0_37, %c0_38] : memref<128x8xf32, #tpu.memory_space<vmem>>, vector<128x8xf32>
    %cst_39 = arith.constant dense<0.000000e+00> : vector<8x8xf32>
    %45 = tpu.matmul %43, %44, %cst_39 {dimension_numbers = #tpu.dot_dimension_numbers<[1], [0], [0], [1], [0, 0, 1, 1], [], []>} : vector<8x128xf32>, vector<128x8xf32>, vector<8x8xf32> -> vector<8x8xf32>
    %c0_40 = arith.constant 0 : index
    %c0_41 = arith.constant 0 : index
    %46 = vector.load %arg9[%c0_40, %c0_41] : memref<8x8xf32, #tpu.memory_space<vmem>>, vector<8x8xf32>
    tpu.vector_store %arg9[%c0_40, %c0_41], %45 {strides = array<i32>} : memref<8x8xf32, #tpu.memory_space<vmem>>, vector<8x8xf32>,
    return
  }
  func.func @transform_0(%arg0: i32) -> (i32, i32, i32) {
    %c0_i32 = arith.constant 0 : i32
    %c0_i32_0 = arith.constant 0 : i32
    %c0_i32_1 = arith.constant 0 : i32
    return %c0_i32, %arg0, %c0_i32_0 : i32, i32, i32
  }
  func.func @transform_1(%arg0: i32) -> (i32, i32, i32) {
    %c0_i32 = arith.constant 0 : i32
    %c0_i32_0 = arith.constant 0 : i32
    %c0_i32_1 = arith.constant 0 : i32
    %c0_i32_2 = arith.constant 0 : i32
    return %c0_i32, %c0_i32_0, %c0_i32_1 : i32, i32, i32
  }
  func.func @transform_2(%arg0: i32) -> (i32, i32) {
    %c0_i32 = arith.constant 0 : i32
    %c0_i32_0 = arith.constant 0 : i32
    %c0_i32_1 = arith.constant 0 : i32
    return %c0_i32, %c0_i32_0 : i32, i32
  }
  func.func @transform_3(%arg0: i32) -> (i32, i32) {
    %c0_i32 = arith.constant 0 : i32
    %c0_i32_0 = arith.constant 0 : i32
    %c0_i32_1 = arith.constant 0 : i32
    return %c0_i32, %c0_i32_0 : i32, i32
  }
  func.func @transform_4(%arg0: i32) -> (i32, i32) {
    %c0_i32 = arith.constant 0 : i32
    %c0_i32_0 = arith.constant 0 : i32
    %c0_i32_1 = arith.constant 0 : i32
    return %c0_i32, %c0_i32_0 : i32, i32
  }
  func.func @transform_5(%arg0: i32) -> (i32, i32) {
    %c0_i32 = arith.constant 0 : i32
    %c0_i32_0 = arith.constant 0 : i32
    %c0_i32_1 = arith.constant 0 : i32
    return %c0_i32, %c0_i32_0 : i32, i32
  }
  func.func @transform_6(%arg0: i32) -> (i32, i32) {
    %c0_i32 = arith.constant 0 : i32
    %c0_i32_0 = arith.constant 0 : i32
    %c0_i32_1 = arith.constant 0 : i32
    return %c0_i32, %c0_i32_0 : i32, i32
  }
  func.func @transform_7(%arg0: i32) -> (i32, i32) {
    %c0_i32 = arith.constant 0 : i32
    %c0_i32_0 = arith.constant 0 : i32
    %c0_i32_1 = arith.constant 0 : i32
    return %c0_i32, %c0_i32_0 : i32, i32
  }
  func.func @transform_8(%arg0: i32) -> (i32, i32) {
    %c0_i32 = arith.constant 0 : i32
    %c0_i32_0 = arith.constant 0 : i32
    return %arg0, %c0_i32 : i32, i32
  }
}

</mosaic_0001>

<llo_original>
// kernel: tpu_custom_call.1
$region0: #{tpu_custom_call.1}
  #allocation0 [shape = 'u32[]', space=smem, size = 0x4, offset = 0x4, fixed_abs, tag = 'smem constant byte address 0x4 - core index']
  #allocation1 [shape = 'u32[144,128]{1,0:T(1,128)}', space=vmem, size = 0x12000, scoped, tag = 'internal scratch']
  %s0 = inlined_call_operand.hbm [shape: f32[4,8,16], index: 0, kind: input, shape index: {}]
  %s1 = inlined_call_operand.hbm [shape: f32[4,16,384], index: 1, kind: input, shape index: {}]
  %s2 = inlined_call_operand.vmem [shape: f32[1,384], index: 2, kind: input, shape index: {}]
  %s3 = inlined_call_operand.hbm [shape: f32[384,128], index: 3, kind: input, shape index: {}]
  %s4 = inlined_call_operand.vmem [shape: f32[128,128], index: 4, kind: input, shape index: {}]
  %s5 = inlined_call_operand.vmem [shape: f32[1,128], index: 5, kind: input, shape index: {}]
  %s6 = inlined_call_operand.vmem [shape: f32[1,128], index: 6, kind: input, shape index: {}]
  %s7 = inlined_call_operand.vmem [shape: f32[128,8], index: 7, kind: input, shape index: {}]
  %s8 = inlined_call_operand.hbm [shape: f32[8,8], index: 8, kind: output, shape index: {}]
  %s9 = sld [smem:[#allocation0]]
  $region54: #{tpu_custom_call.1} parent=0
    _
  %s11 = ssub.s32 1, %s9
  %s12 = scalar_select 0, %s11, %s9
  $region1: #{tpu_custom_call.1} parent=0
    #allocation2 [shape = 'u8[16384]{0}', space=vmem, size = 0x4000, scoped, tag = 'input window, operand 0, single buffered']
    #allocation3 [shape = 's32[1]{0}', space=sflag, size = 0x4, scoped, tag = 'scoped memory for tpu_custom_call.1']
    #allocation4 [shape = 's32[1]{0}', space=sflag, size = 0x4, scoped, tag = 'scoped memory for tpu_custom_call.1']
    #allocation5 [shape = 'u8[98304]{0}', space=vmem, size = 0x18000, scoped, tag = 'input window, operand 1, single buffered']
    #allocation6 [shape = 's32[1]{0}', space=sflag, size = 0x4, scoped, tag = 'scoped memory for tpu_custom_call.1']
    #allocation7 [shape = 'u8[196608]{0}', space=vmem, size = 0x30000, scoped, tag = 'input window, operand 3, single buffered']
    #allocation8 [shape = 'u8[4096]{0}', space=vmem, size = 0x1000, scoped, tag = 'output window, operand 0, single buffered']
    %13 = vsyncpa [#allocation3], 0
    %14 = vsyncpa [#allocation6], 0
    %15 = vsyncpa [#allocation4], 0
    // Predicated region
    $region2: #{tpu_custom_call.1} parent=1 // pred_check
      _
    $region3: #{tpu_custom_call.1} parent=1 // pred_check_branch
      %17 = sbr.rel (0) target = $region5
    $region4: #{tpu_custom_call.1} parent=1 // pred_region
      %s19 = ssub.s32 512, 512
      %20 = vsyncadd [#allocation3], %s19
      %s21 = sshll.u32 [#allocation2], 4
      %s22 = int_to_ptr.vmem [resolvable:$true] %s21
      %27 = dma.hbm_to_vmem [thread:$0]  %s0, 512, %s22, [#allocation3], 128, 128, 8
    $region5: #{tpu_custom_call.1} parent=1 // pred_fallthru
      _
    // Predicated region
    $region6: #{tpu_custom_call.1} parent=1 // pred_check
      _
    $region7: #{tpu_custom_call.1} parent=1 // pred_check_branch
      %29 = sbr.rel (0) target = $region9
    $region8: #{tpu_custom_call.1} parent=1 // pred_region
      %s31 = ssub.s32 3072, 3072
      %32 = vsyncadd [#allocation6], %s31
      %s33 = sshll.u32 [#allocation5], 4
      %s34 = int_to_ptr.vmem [resolvable:$true] %s33
      %39 = dma.hbm_to_vmem [thread:$0]  %s1, 3072, %s34, [#allocation6], 384, 384, 24
    $region9: #{tpu_custom_call.1} parent=1 // pred_fallthru
      _
    // Predicated region
    $region10: #{tpu_custom_call.1} parent=1 // pred_check
      _
    $region11: #{tpu_custom_call.1} parent=1 // pred_check_branch
      %41 = sbr.rel (0) target = $region13
    $region12: #{tpu_custom_call.1} parent=1 // pred_region
      _
    $region13: #{tpu_custom_call.1} parent=1 // pred_fallthru
      _
    // Predicated region
    $region14: #{tpu_custom_call.1} parent=1 // pred_check
      _
    $region15: #{tpu_custom_call.1} parent=1 // pred_check_branch
      %43 = sbr.rel (0) target = $region17
    $region16: #{tpu_custom_call.1} parent=1 // pred_region
      %s45 = ssub.s32 6144, 6144
      %46 = vsyncadd [#allocation6], %s45
      %s47 = sshll.u32 [#allocation7], 4
      %s48 = int_to_ptr.vmem [resolvable:$true] %s47
      %53 = dma.hbm_to_vmem [thread:$0]  %s3, 6144, %s48, [#allocation6], 128, 128, 8
    $region17: #{tpu_custom_call.1} parent=1 // pred_fallthru
      _
    // Predicated region
    $region18: #{tpu_custom_call.1} parent=1 // pred_check
      _
    $region19: #{tpu_custom_call.1} parent=1 // pred_check_branch
      %55 = sbr.rel (0) target = $region21
    $region20: #{tpu_custom_call.1} parent=1 // pred_region
      _
    $region21: #{tpu_custom_call.1} parent=1 // pred_fallthru
      _
    // Predicated region
    $region22: #{tpu_custom_call.1} parent=1 // pred_check
      _
    $region23: #{tpu_custom_call.1} parent=1 // pred_check_branch
      %57 = sbr.rel (0) target = $region25
    $region24: #{tpu_custom_call.1} parent=1 // pred_region
      _
    $region25: #{tpu_custom_call.1} parent=1 // pred_fallthru
      _
    // Predicated region
    $region26: #{tpu_custom_call.1} parent=1 // pred_check
      _
    $region27: #{tpu_custom_call.1} parent=1 // pred_check_branch
      %59 = sbr.rel (0) target = $region29
    $region28: #{tpu_custom_call.1} parent=1 // pred_region
      _
    $region29: #{tpu_custom_call.1} parent=1 // pred_fallthru
      _
    // Predicated region
    $region30: #{tpu_custom_call.1} parent=1 // pred_check
      _
    $region31: #{tpu_custom_call.1} parent=1 // pred_check_branch
      %61 = sbr.rel (0) target = $region33
    $region32: #{tpu_custom_call.1} parent=1 // pred_region
      _
    $region33: #{tpu_custom_call.1} parent=1 // pred_fallthru
      _
    // Predicated region
    $region34: #{tpu_custom_call.1} parent=1 // pred_check
      _
    $region35: #{tpu_custom_call.1} parent=1 // pred_check_branch
      %63 = sbr.rel (0) target = $region37
    $region36: #{tpu_custom_call.1} parent=1 // pred_region
      %64 = dma.done [#allocation3], 512
    $region37: #{tpu_custom_call.1} parent=1 // pred_fallthru
      _
    // Predicated region
    $region38: #{tpu_custom_call.1} parent=1 // pred_check
      _
    $region39: #{tpu_custom_call.1} parent=1 // pred_check_branch
      %66 = sbr.rel (0) target = $region41
    $region40: #{tpu_custom_call.1} parent=1 // pred_region
      %67 = dma.done [#allocation6], 3072
    $region41: #{tpu_custom_call.1} parent=1 // pred_fallthru
      _
    // Predicated region
    $region42: #{tpu_custom_call.1} parent=1 // pred_check
      _
    $region43: #{tpu_custom_call.1} parent=1 // pred_check_branch
      %69 = sbr.rel (0) target = $region45
    $region44: #{tpu_custom_call.1} parent=1 // pred_region
      %70 = dma.done [#allocation6], 6144
    $region45: #{tpu_custom_call.1} parent=1 // pred_fallthru
      _
    %v71 = vld [vmem:[#allocation2] sm:$0xff]
    %v72 = vld [vmem:[#allocation5] sm:$0xff]
    %v73 = vld [vmem:[#allocation5 + $0x8] sm:$0xff]
    %v74 = vld [vmem:[#allocation5 + $0x10] sm:$0xff]
    %v75 = vld [vmem:[#allocation5 + $0x18] sm:$0xff]
    %v76 = vld [vmem:[#allocation5 + $0x20] sm:$0xff]
    %v77 = vld [vmem:[#allocation5 + $0x28] sm:$0xff]
    %s78 = scalar_lea.vmem [#allocation2], 8
    %v79 = vld [vmem:[%s78] sm:$0xff]
    %s80 = scalar_lea.vmem [#allocation5], 48
    %v81 = vld [vmem:[%s80] sm:$0xff]
    %v82 = vld [vmem:[%s80 + $0x8] sm:$0xff]
    %v83 = vld [vmem:[%s80 + $0x10] sm:$0xff]
    %v84 = vld [vmem:[%s80 + $0x18] sm:$0xff]
    %v85 = vld [vmem:[%s80 + $0x20] sm:$0xff]
    %v86 = vld [vmem:[%s80 + $0x28] sm:$0xff]
    %vm87 = vcmask 130048
    %v89 = vsel %vm87, %v79, 0
    %91 = vmatprep.subr.mxu0 0.0
    %92 = vmatpush1.msra.mxu0 0.0
    %93 = vmatprep.subr.mxu0 0.0
    %94 = vmatpush1.msra.mxu0 0.0
    %95 = vmatprep.subr.mxu0 0.0
    %96 = vmatpush1.msra.mxu0 0.0
    %97 = vmatprep.subr.mxu0 0.0
    %98 = vmatpush1.msra.mxu0 0.0
    %99 = vmatprep.subr.mxu0 0.0
    %100 = vmatpush1.msra.mxu0 0.0
    %101 = vmatprep.subr.mxu0 0.0
    %102 = vmatpush1.msra.mxu0 0.0
    %103 = vmatprep.subr.mxu0 0.0
    %104 = vmatpush1.msra.mxu0 0.0
    %105 = vmatprep.subr.mxu0 0.0
    %106 = vmatpush1.msra.mxu0 0.0
    %107 = vmatprep.subr.mxu0 0.0
    %108 = vmatpush1.msra.mxu0 0.0
    %109 = vmatprep.subr.mxu0 0.0
    %110 = vmatpush1.msra.mxu0 0.0
    %111 = vmatprep.subr.mxu0 0.0
    %112 = vmatpush1.msra.mxu0 0.0
    %113 = vmatprep.subr.mxu0 0.0
    %114 = vmatpush1.msra.mxu0 0.0
    %115 = vmatprep.subr.mxu0 0.0
    %116 = vmatpush1.msra.mxu0 0.0
    %117 = vmatprep.subr.mxu0 0.0
    %118 = vmatpush1.msra.mxu0 0.0
    %119 = vmatprep.subr.mxu0 %v85
    %120 = vmatpush1.msra.mxu0 %v84
    %121 = vmatprep.subr.mxu0 %v82
    %122 = vmatpush1.msra.mxu0 %v81
    %123 = vmatprep.subr.mxu0 0.0
    %124 = vmatpush2.msra.mxu0 0.0
    %125 = vmatprep.subr.mxu0 0.0
    %126 = vmatpush2.msra.mxu0 0.0
    %127 = vmatprep.subr.mxu0 0.0
    %128 = vmatpush2.msra.mxu0 0.0
    %129 = vmatprep.subr.mxu0 0.0
    %130 = vmatpush2.msra.mxu0 0.0
    %131 = vmatprep.subr.mxu0 0.0
    %132 = vmatpush2.msra.mxu0 0.0
    %133 = vmatprep.subr.mxu0 0.0
    %134 = vmatpush2.msra.mxu0 0.0
    %135 = vmatprep.subr.mxu0 0.0
    %136 = vmatpush2.msra.mxu0 0.0
    %137 = vmatprep.subr.mxu0 0.0
    %138 = vmatpush2.msra.mxu0 0.0
    %139 = vmatprep.subr.mxu0 0.0
    %140 = vmatpush2.msra.mxu0 0.0
    %141 = vmatprep.subr.mxu0 0.0
    %142 = vmatpush2.msra.mxu0 0.0
    %143 = vmatprep.subr.mxu0 0.0
    %144 = vmatpush2.msra.mxu0 0.0
    %145 = vmatprep.subr.mxu0 0.0
    %146 = vmatpush2.msra.mxu0 0.0
    %147 = vmatprep.subr.mxu0 0.0
    %148 = vmatpush2.msra.mxu0 0.0
    %149 = vmatprep.subr.mxu0 0.0
    %150 = vmatpush2.msra.mxu0 0.0
    %151 = vmatprep.subr.mxu0 0.0
    %152 = vmatpush2.msra.mxu0 0.0
    %153 = vmatprep.subr.mxu0 0.0
    %154 = vmatpush2.msra.mxu0 0.0
    %155 = vmatprep.mubr.f32.mxu0 0.0
    %156 = vmatmul.mubr.f32.gmra.mxu0 %v89
    %v157 = vpop.f32.mrf.mxu0
    %v158 = vadd.f32 0.0, %v157
    %v159 = vpop.f32.mrf.mxu0
    %v160 = vadd.f32 0.0, %v159
    %161 = vdwg.mxu0
    %162 = vmatprep.subr.mxu0 0.0
    %163 = vmatpush1.msra.mxu0 0.0
    %164 = vmatprep.subr.mxu0 0.0
    %165 = vmatpush1.msra.mxu0 0.0
    %166 = vmatprep.subr.mxu0 0.0
    %167 = vmatpush1.msra.mxu0 0.0
    %168 = vmatprep.subr.mxu0 0.0
    %169 = vmatpush1.msra.mxu0 0.0
    %170 = vmatprep.subr.mxu0 0.0
    %171 = vmatpush1.msra.mxu0 0.0
    %172 = vmatprep.subr.mxu0 0.0
    %173 = vmatpush1.msra.mxu0 0.0
    %174 = vmatprep.subr.mxu0 0.0
    %175 = vmatpush1.msra.mxu0 0.0
    %176 = vmatprep.subr.mxu0 0.0
    %177 = vmatpush1.msra.mxu0 0.0
    %178 = vmatprep.subr.mxu0 0.0
    %179 = vmatpush1.msra.mxu0 0.0
    %180 = vmatprep.subr.mxu0 0.0
    %181 = vmatpush1.msra.mxu0 0.0
    %182 = vmatprep.subr.mxu0 0.0
    %183 = vmatpush1.msra.mxu0 0.0
    %184 = vmatprep.subr.mxu0 0.0
    %185 = vmatpush1.msra.mxu0 0.0
    %186 = vmatprep.subr.mxu0 0.0
    %187 = vmatpush1.msra.mxu0 0.0
    %188 = vmatprep.subr.mxu0 0.0
    %189 = vmatpush1.msra.mxu0 0.0
    %190 = vmatprep.subr.mxu0 0.0
    %191 = vmatpush1.msra.mxu0 %v86
    %192 = vmatprep.subr.mxu0 0.0
    %193 = vmatpush1.msra.mxu0 %v83
    %194 = vmatprep.subr.mxu0 0.0
    %195 = vmatpush2.msra.mxu0 0.0
    %196 = vmatprep.subr.mxu0 0.0
    %197 = vmatpush2.msra.mxu0 0.0
    %198 = vmatprep.subr.mxu0 0.0
    %199 = vmatpush2.msra.mxu0 0.0
    %200 = vmatprep.subr.mxu0 0.0
    %201 = vmatpush2.msra.mxu0 0.0
    %202 = vmatprep.subr.mxu0 0.0
    %203 = vmatpush2.msra.mxu0 0.0
    %204 = vmatprep.subr.mxu0 0.0
    %205 = vmatpush2.msra.mxu0 0.0
    %206 = vmatprep.subr.mxu0 0.0
    %207 = vmatpush2.msra.mxu0 0.0
    %208 = vmatprep.subr.mxu0 0.0
    %209 = vmatpush2.msra.mxu0 0.0
    %210 = vmatprep.subr.mxu0 0.0
    %211 = vmatpush2.msra.mxu0 0.0
    %212 = vmatprep.subr.mxu0 0.0
    %213 = vmatpush2.msra.mxu0 0.0
    %214 = vmatprep.subr.mxu0 0.0
    %215 = vmatpush2.msra.mxu0 0.0
    %216 = vmatprep.subr.mxu0 0.0
    %217 = vmatpush2.msra.mxu0 0.0
    %218 = vmatprep.subr.mxu0 0.0
    %219 = vmatpush2.msra.mxu0 0.0
    %220 = vmatprep.subr.mxu0 0.0
    %221 = vmatpush2.msra.mxu0 0.0
    %222 = vmatprep.subr.mxu0 0.0
    %223 = vmatpush2.msra.mxu0 0.0
    %224 = vmatprep.subr.mxu0 0.0
    %225 = vmatpush2.msra.mxu0 0.0
    %226 = vmatprep.mubr.f32.mxu0 0.0
    %227 = vmatmul.mubr.f32.gmra.mxu0 %v89
    %v228 = vpop.f32.mrf.mxu0
    %v229 = vadd.f32 0.0, %v228
    %v230 = vpop.f32.mrf.mxu0
    %231 = vdwg.mxu0
    %v233 = vsel %vm87, %v71, 0
    %235 = vmatprep.subr.mxu0 0.0
    %236 = vmatpush1.msra.mxu0 0.0
    %237 = vmatprep.subr.mxu0 0.0
    %238 = vmatpush1.msra.mxu0 0.0
    %239 = vmatprep.subr.mxu0 0.0
    %240 = vmatpush1.msra.mxu0 0.0
    %241 = vmatprep.subr.mxu0 0.0
    %242 = vmatpush1.msra.mxu0 0.0
    %243 = vmatprep.subr.mxu0 0.0
    %244 = vmatpush1.msra.mxu0 0.0
    %245 = vmatprep.subr.mxu0 0.0
    %246 = vmatpush1.msra.mxu0 0.0
    %247 = vmatprep.subr.mxu0 0.0
    %248 = vmatpush1.msra.mxu0 0.0
    %249 = vmatprep.subr.mxu0 0.0
    %250 = vmatpush1.msra.mxu0 0.0
    %251 = vmatprep.subr.mxu0 0.0
    %252 = vmatpush1.msra.mxu0 0.0
    %253 = vmatprep.subr.mxu0 0.0
    %254 = vmatpush1.msra.mxu0 0.0
    %255 = vmatprep.subr.mxu0 0.0
    %256 = vmatpush1.msra.mxu0 0.0
    %257 = vmatprep.subr.mxu0 0.0
    %258 = vmatpush1.msra.mxu0 0.0
    %259 = vmatprep.subr.mxu0 0.0
    %260 = vmatpush1.msra.mxu0 0.0
    %261 = vmatprep.subr.mxu0 0.0
    %262 = vmatpush1.msra.mxu0 0.0
    %263 = vmatprep.subr.mxu0 %v76
    %264 = vmatpush1.msra.mxu0 %v75
    %265 = vmatprep.subr.mxu0 %v73
    %266 = vmatpush1.msra.mxu0 %v72
    %267 = vmatprep.subr.mxu0 0.0
    %268 = vmatpush2.msra.mxu0 0.0
    %269 = vmatprep.subr.mxu0 0.0
    %270 = vmatpush2.msra.mxu0 0.0
    %271 = vmatprep.subr.mxu0 0.0
    %272 = vmatpush2.msra.mxu0 0.0
    %273 = vmatprep.subr.mxu0 0.0
    %274 = vmatpush2.msra.mxu0 0.0
    %275 = vmatprep.subr.mxu0 0.0
    %276 = vmatpush2.msra.mxu0 0.0
    %277 = vmatprep.subr.mxu0 0.0
    %278 = vmatpush2.msra.mxu0 0.0
    %279 = vmatprep.subr.mxu0 0.0
    %280 = vmatpush2.msra.mxu0 0.0
    %281 = vmatprep.subr.mxu0 0.0
    %282 = vmatpush2.msra.mxu0 0.0
    %283 = vmatprep.subr.mxu0 0.0
    %284 = vmatpush2.msra.mxu0 0.0
    %285 = vmatprep.subr.mxu0 0.0
    %286 = vmatpush2.msra.mxu0 0.0
    %287 = vmatprep.subr.mxu0 0.0
    %288 = vmatpush2.msra.mxu0 0.0
    %289 = vmatprep.subr.mxu0 0.0
    %290 = vmatpush2.msra.mxu0 0.0
    %291 = vmatprep.subr.mxu0 0.0
    %292 = vmatpush2.msra.mxu0 0.0
    %293 = vmatprep.subr.mxu0 0.0
    %294 = vmatpush2.msra.mxu0 0.0
    %295 = vmatprep.subr.mxu0 0.0
    %296 = vmatpush2.msra.mxu0 0.0
    %297 = vmatprep.subr.mxu0 0.0
    %298 = vmatpush2.msra.mxu0 0.0
    %299 = vmatprep.mubr.f32.mxu0 0.0
    %300 = vmatmul.mubr.f32.gmra.mxu0 %v233
    %v301 = vpop.f32.mrf.mxu0
    %v302 = vadd.f32 %v158, %v301
    %v303 = vpop.f32.mrf.mxu0
    %v304 = vadd.f32 %v160, %v303
    %305 = vdwg.mxu0
    %306 = vmatprep.subr.mxu0 0.0
    %307 = vmatpush1.msra.mxu0 0.0
    %308 = vmatprep.subr.mxu0 0.0
    %309 = vmatpush1.msra.mxu0 0.0
    %310 = vmatprep.subr.mxu0 0.0
    %311 = vmatpush1.msra.mxu0 0.0
    %312 = vmatprep.subr.mxu0 0.0
    %313 = vmatpush1.msra.mxu0 0.0
    %314 = vmatprep.subr.mxu0 0.0
    %315 = vmatpush1.msra.mxu0 0.0
    %316 = vmatprep.subr.mxu0 0.0
    %317 = vmatpush1.msra.mxu0 0.0
    %318 = vmatprep.subr.mxu0 0.0
    %319 = vmatpush1.msra.mxu0 0.0
    %320 = vmatprep.subr.mxu0 0.0
    %321 = vmatpush1.msra.mxu0 0.0
    %322 = vmatprep.subr.mxu0 0.0
    %323 = vmatpush1.msra.mxu0 0.0
    %324 = vmatprep.subr.mxu0 0.0
    %325 = vmatpush1.msra.mxu0 0.0
    %326 = vmatprep.subr.mxu0 0.0
    %327 = vmatpush1.msra.mxu0 0.0
    %328 = vmatprep.subr.mxu0 0.0
    %329 = vmatpush1.msra.mxu0 0.0
    %330 = vmatprep.subr.mxu0 0.0
    %331 = vmatpush1.msra.mxu0 0.0
    %332 = vmatprep.subr.mxu0 0.0
    %333 = vmatpush1.msra.mxu0 0.0
    %334 = vmatprep.subr.mxu0 0.0
    %335 = vmatpush1.msra.mxu0 %v77
    %336 = vmatprep.subr.mxu0 0.0
    %337 = vmatpush1.msra.mxu0 %v74
    %338 = vmatprep.subr.mxu0 0.0
    %339 = vmatpush2.msra.mxu0 0.0
    %340 = vmatprep.subr.mxu0 0.0
    %341 = vmatpush2.msra.mxu0 0.0
    %342 = vmatprep.subr.mxu0 0.0
    %343 = vmatpush2.msra.mxu0 0.0
    %344 = vmatprep.subr.mxu0 0.0
    %345 = vmatpush2.msra.mxu0 0.0
    %346 = vmatprep.subr.mxu0 0.0
    %347 = vmatpush2.msra.mxu0 0.0
    %348 = vmatprep.subr.mxu0 0.0
    %349 = vmatpush2.msra.mxu0 0.0
    %350 = vmatprep.subr.mxu0 0.0
    %351 = vmatpush2.msra.mxu0 0.0
    %352 = vmatprep.subr.mxu0 0.0
    %353 = vmatpush2.msra.mxu0 0.0
    %354 = vmatprep.subr.mxu0 0.0
    %355 = vmatpush2.msra.mxu0 0.0
    %356 = vmatprep.subr.mxu0 0.0
    %357 = vmatpush2.msra.mxu0 0.0
    %358 = vmatprep.subr.mxu0 0.0
    %359 = vmatpush2.msra.mxu0 0.0
    %360 = vmatprep.subr.mxu0 0.0
    %361 = vmatpush2.msra.mxu0 0.0
    %362 = vmatprep.subr.mxu0 0.0
    %363 = vmatpush2.msra.mxu0 0.0
    %364 = vmatprep.subr.mxu0 0.0
    %365 = vmatpush2.msra.mxu0 0.0
    %366 = vmatprep.subr.mxu0 0.0
    %367 = vmatpush2.msra.mxu0 0.0
    %368 = vmatprep.subr.mxu0 0.0
    %369 = vmatpush2.msra.mxu0 0.0
    %370 = vmatprep.mubr.f32.mxu0 0.0
    %371 = vmatmul.mubr.f32.gmra.mxu0 %v233
    %v372 = vpop.f32.mrf.mxu0
    %v373 = vadd.f32 %v229, %v372
    %v374 = vpop.f32.mrf.mxu0
    %375 = vdwg.mxu0
    %s376 = scalar_lea.vmem [#allocation2], 16
    %v377 = vld [vmem:[%s376] sm:$0xff]
    %s378 = scalar_lea.vmem [#allocation5], 96
    %v379 = vld [vmem:[%s378] sm:$0xff]
    %v380 = vld [vmem:[%s378 + $0x8] sm:$0xff]
    %v381 = vld [vmem:[%s378 + $0x10] sm:$0xff]
    %v382 = vld [vmem:[%s378 + $0x18] sm:$0xff]
    %v383 = vld [vmem:[%s378 + $0x20] sm:$0xff]
    %v384 = vld [vmem:[%s378 + $0x28] sm:$0xff]
    %v386 = vsel %vm87, %v377, 0
    %388 = vmatprep.subr.mxu0 0.0
    %389 = vmatpush1.msra.mxu0 0.0
    %390 = vmatprep.subr.mxu0 0.0
    %391 = vmatpush1.msra.mxu0 0.0
    %392 = vmatprep.subr.mxu0 0.0
    %393 = vmatpush1.msra.mxu0 0.0
    %394 = vmatprep.subr.mxu0 0.0
    %395 = vmatpush1.msra.mxu0 0.0
    %396 = vmatprep.subr.mxu0 0.0
    %397 = vmatpush1.msra.mxu0 0.0
    %398 = vmatprep.subr.mxu0 0.0
    %399 = vmatpush1.msra.mxu0 0.0
    %400 = vmatprep.subr.mxu0 0.0
    %401 = vmatpush1.msra.mxu0 0.0
    %402 = vmatprep.subr.mxu0 0.0
    %403 = vmatpush1.msra.mxu0 0.0
    %404 = vmatprep.subr.mxu0 0.0
    %405 = vmatpush1.msra.mxu0 0.0
    %406 = vmatprep.subr.mxu0 0.0
    %407 = vmatpush1.msra.mxu0 0.0
    %408 = vmatprep.subr.mxu0 0.0
    %409 = vmatpush1.msra.mxu0 0.0
    %410 = vmatprep.subr.mxu0 0.0
    %411 = vmatpush1.msra.mxu0 0.0
    %412 = vmatprep.subr.mxu0 0.0
    %413 = vmatpush1.msra.mxu0 0.0
    %414 = vmatprep.subr.mxu0 0.0
    %415 = vmatpush1.msra.mxu0 0.0
    %416 = vmatprep.subr.mxu0 %v383
    %417 = vmatpush1.msra.mxu0 %v382
    %418 = vmatprep.subr.mxu0 %v380
    %419 = vmatpush1.msra.mxu0 %v379
    %420 = vmatprep.subr.mxu0 0.0
    %421 = vmatpush2.msra.mxu0 0.0
    %422 = vmatprep.subr.mxu0 0.0
    %423 = vmatpush2.msra.mxu0 0.0
    %424 = vmatprep.subr.mxu0 0.0
    %425 = vmatpush2.msra.mxu0 0.0
    %426 = vmatprep.subr.mxu0 0.0
    %427 = vmatpush2.msra.mxu0 0.0
    %428 = vmatprep.subr.mxu0 0.0
    %429 = vmatpush2.msra.mxu0 0.0
    %430 = vmatprep.subr.mxu0 0.0
    %431 = vmatpush2.msra.mxu0 0.0
    %432 = vmatprep.subr.mxu0 0.0
    %433 = vmatpush2.msra.mxu0 0.0
    %434 = vmatprep.subr.mxu0 0.0
    %435 = vmatpush2.msra.mxu0 0.0
    %436 = vmatprep.subr.mxu0 0.0
    %437 = vmatpush2.msra.mxu0 0.0
    %438 = vmatprep.subr.mxu0 0.0
    %439 = vmatpush2.msra.mxu0 0.0
    %440 = vmatprep.subr.mxu0 0.0
    %441 = vmatpush2.msra.mxu0 0.0
    %442 = vmatprep.subr.mxu0 0.0
    %443 = vmatpush2.msra.mxu0 0.0
    %444 = vmatprep.subr.mxu0 0.0
    %445 = vmatpush2.msra.mxu0 0.0
    %446 = vmatprep.subr.mxu0 0.0
    %447 = vmatpush2.msra.mxu0 0.0
    %448 = vmatprep.subr.mxu0 0.0
    %449 = vmatpush2.msra.mxu0 0.0
    %450 = vmatprep.subr.mxu0 0.0
    %451 = vmatpush2.msra.mxu0 0.0
    %452 = vmatprep.mubr.f32.mxu0 0.0
    %453 = vmatmul.mubr.f32.gmra.mxu0 %v386
    %v454 = vpop.f32.mrf.mxu0
    %v455 = vadd.f32 0.0, %v454
    %v456 = vpop.f32.mrf.mxu0
    %v457 = vadd.f32 0.0, %v456
    %458 = vdwg.mxu0
    %459 = vmatprep.subr.mxu0 0.0
    %460 = vmatpush1.msra.mxu0 0.0
    %461 = vmatprep.subr.mxu0 0.0
    %462 = vmatpush1.msra.mxu0 0.0
    %463 = vmatprep.subr.mxu0 0.0
    %464 = vmatpush1.msra.mxu0 0.0
    %465 = vmatprep.subr.mxu0 0.0
    %466 = vmatpush1.msra.mxu0 0.0
    %467 = vmatprep.subr.mxu0 0.0
    %468 = vmatpush1.msra.mxu0 0.0
    %469 = vmatprep.subr.mxu0 0.0
    %470 = vmatpush1.msra.mxu0 0.0
    %471 = vmatprep.subr.mxu0 0.0
    %472 = vmatpush1.msra.mxu0 0.0
    %473 = vmatprep.subr.mxu0 0.0
    %474 = vmatpush1.msra.mxu0 0.0
    %475 = vmatprep.subr.mxu0 0.0
    %476 = vmatpush1.msra.mxu0 0.0
    %477 = vmatprep.subr.mxu0 0.0
    %478 = vmatpush1.msra.mxu0 0.0
    %479 = vmatprep.subr.mxu0 0.0
    %480 = vmatpush1.msra.mxu0 0.0
    %481 = vmatprep.subr.mxu0 0.0
    %482 = vmatpush1.msra.mxu0 0.0
    %483 = vmatprep.subr.mxu0 0.0
    %484 = vmatpush1.msra.mxu0 0.0
    %485 = vmatprep.subr.mxu0 0.0
    %486 = vmatpush1.msra.mxu0 0.0
    %487 = vmatprep.subr.mxu0 0.0
    %488 = vmatpush1.msra.mxu0 %v384
    %489 = vmatprep.subr.mxu0 0.0
    %490 = vmatpush1.msra.mxu0 %v381
    %491 = vmatprep.subr.mxu0 0.0
    %492 = vmatpush2.msra.mxu0 0.0
    %493 = vmatprep.subr.mxu0 0.0
    %494 = vmatpush2.msra.mxu0 0.0
    %495 = vmatprep.subr.mxu0 0.0
    %496 = vmatpush2.msra.mxu0 0.0
    %497 = vmatprep.subr.mxu0 0.0
    %498 = vmatpush2.msra.mxu0 0.0
    %499 = vmatprep.subr.mxu0 0.0
    %500 = vmatpush2.msra.mxu0 0.0
    %501 = vmatprep.subr.mxu0 0.0
    %502 = vmatpush2.msra.mxu0 0.0
    %503 = vmatprep.subr.mxu0 0.0
    %504 = vmatpush2.msra.mxu0 0.0
    %505 = vmatprep.subr.mxu0 0.0
    %506 = vmatpush2.msra.mxu0 0.0
    %507 = vmatprep.subr.mxu0 0.0
    %508 = vmatpush2.msra.mxu0 0.0
    %509 = vmatprep.subr.mxu0 0.0
    %510 = vmatpush2.msra.mxu0 0.0
    %511 = vmatprep.subr.mxu0 0.0
    %512 = vmatpush2.msra.mxu0 0.0
    %513 = vmatprep.subr.mxu0 0.0
    %514 = vmatpush2.msra.mxu0 0.0
    %515 = vmatprep.subr.mxu0 0.0
    %516 = vmatpush2.msra.mxu0 0.0
    %517 = vmatprep.subr.mxu0 0.0
    %518 = vmatpush2.msra.mxu0 0.0
    %519 = vmatprep.subr.mxu0 0.0
    %520 = vmatpush2.msra.mxu0 0.0
    %521 = vmatprep.subr.mxu0 0.0
    %522 = vmatpush2.msra.mxu0 0.0
    %523 = vmatprep.mubr.f32.mxu0 0.0
    %524 = vmatmul.mubr.f32.gmra.mxu0 %v386
    %v525 = vpop.f32.mrf.mxu0
    %v526 = vadd.f32 0.0, %v525
    %v527 = vpop.f32.mrf.mxu0
    %528 = vdwg.mxu0
    %v529 = vadd.f32 %v302, %v455
    %v530 = vadd.f32 %v304, %v457
    %v531 = vadd.f32 %v373, %v526
    %s532 = scalar_lea.vmem [#allocation2], 24
    %v533 = vld [vmem:[%s532] sm:$0xff]
    %s534 = scalar_lea.vmem [#allocation5], 144
    %v535 = vld [vmem:[%s534] sm:$0xff]
    %v536 = vld [vmem:[%s534 + $0x8] sm:$0xff]
    %v537 = vld [vmem:[%s534 + $0x10] sm:$0xff]
    %v538 = vld [vmem:[%s534 + $0x18] sm:$0xff]
    %v539 = vld [vmem:[%s534 + $0x20] sm:$0xff]
    %v540 = vld [vmem:[%s534 + $0x28] sm:$0xff]
    %v542 = vsel %vm87, %v533, 0
    %544 = vmatprep.subr.mxu0 0.0
    %545 = vmatpush1.msra.mxu0 0.0
    %546 = vmatprep.subr.mxu0 0.0
    %547 = vmatpush1.msra.mxu0 0.0
    %548 = vmatprep.subr.mxu0 0.0
    %549 = vmatpush1.msra.mxu0 0.0
    %550 = vmatprep.subr.mxu0 0.0
    %551 = vmatpush1.msra.mxu0 0.0
    %552 = vmatprep.subr.mxu0 0.0
    %553 = vmatpush1.msra.mxu0 0.0
    %554 = vmatprep.subr.mxu0 0.0
    %555 = vmatpush1.msra.mxu0 0.0
    %556 = vmatprep.subr.mxu0 0.0
    %557 = vmatpush1.msra.mxu0 0.0
    %558 = vmatprep.subr.mxu0 0.0
    %559 = vmatpush1.msra.mxu0 0.0
    %560 = vmatprep.subr.mxu0 0.0
    %561 = vmatpush1.msra.mxu0 0.0
    %562 = vmatprep.subr.mxu0 0.0
    %563 = vmatpush1.msra.mxu0 0.0
    %564 = vmatprep.subr.mxu0 0.0
    %565 = vmatpush1.msra.mxu0 0.0
    %566 = vmatprep.subr.mxu0 0.0
    %567 = vmatpush1.msra.mxu0 0.0
    %568 = vmatprep.subr.mxu0 0.0
    %569 = vmatpush1.msra.mxu0 0.0
    %570 = vmatprep.subr.mxu0 0.0
    %571 = vmatpush1.msra.mxu0 0.0
    %572 = vmatprep.subr.mxu0 %v539
    %573 = vmatpush1.msra.mxu0 %v538
    %574 = vmatprep.subr.mxu0 %v536
    %575 = vmatpush1.msra.mxu0 %v535
    %576 = vmatprep.subr.mxu0 0.0
    %577 = vmatpush2.msra.mxu0 0.0
    %578 = vmatprep.subr.mxu0 0.0
    %579 = vmatpush2.msra.mxu0 0.0
    %580 = vmatprep.subr.mxu0 0.0
    %581 = vmatpush2.msra.mxu0 0.0
    %582 = vmatprep.subr.mxu0 0.0
    %583 = vmatpush2.msra.mxu0 0.0
    %584 = vmatprep.subr.mxu0 0.0
    %585 = vmatpush2.msra.mxu0 0.0
    %586 = vmatprep.subr.mxu0 0.0
    %587 = vmatpush2.msra.mxu0 0.0
    %588 = vmatprep.subr.mxu0 0.0
    %589 = vmatpush2.msra.mxu0 0.0
    %590 = vmatprep.subr.mxu0 0.0
    %591 = vmatpush2.msra.mxu0 0.0
    %592 = vmatprep.subr.mxu0 0.0
    %593 = vmatpush2.msra.mxu0 0.0
    %594 = vmatprep.subr.mxu0 0.0
    %595 = vmatpush2.msra.mxu0 0.0
    %596 = vmatprep.subr.mxu0 0.0
    %597 = vmatpush2.msra.mxu0 0.0
    %598 = vmatprep.subr.mxu0 0.0
    %599 = vmatpush2.msra.mxu0 0.0
    %600 = vmatprep.subr.mxu0 0.0
    %601 = vmatpush2.msra.mxu0 0.0
    %602 = vmatprep.subr.mxu0 0.0
    %603 = vmatpush2.msra.mxu0 0.0
    %604 = vmatprep.subr.mxu0 0.0
    %605 = vmatpush2.msra.mxu0 0.0
    %606 = vmatprep.subr.mxu0 0.0
    %607 = vmatpush2.msra.mxu0 0.0
    %608 = vmatprep.mubr.f32.mxu0 0.0
    %609 = vmatmul.mubr.f32.gmra.mxu0 %v542
    %v610 = vpop.f32.mrf.mxu0
    %v611 = vadd.f32 0.0, %v610
    %v612 = vpop.f32.mrf.mxu0
    %v613 = vadd.f32 0.0, %v612
    %614 = vdwg.mxu0
    %615 = vmatprep.subr.mxu0 0.0
    %616 = vmatpush1.msra.mxu0 0.0
    %617 = vmatprep.subr.mxu0 0.0
    %618 = vmatpush1.msra.mxu0 0.0
    %619 = vmatprep.subr.mxu0 0.0
    %620 = vmatpush1.msra.mxu0 0.0
    %621 = vmatprep.subr.mxu0 0.0
    %622 = vmatpush1.msra.mxu0 0.0
    %623 = vmatprep.subr.mxu0 0.0
    %624 = vmatpush1.msra.mxu0 0.0
    %625 = vmatprep.subr.mxu0 0.0
    %626 = vmatpush1.msra.mxu0 0.0
    %627 = vmatprep.subr.mxu0 0.0
    %628 = vmatpush1.msra.mxu0 0.0
    %629 = vmatprep.subr.mxu0 0.0
    %630 = vmatpush1.msra.mxu0 0.0
    %631 = vmatprep.subr.mxu0 0.0
    %632 = vmatpush1.msra.mxu0 0.0
    %633 = vmatprep.subr.mxu0 0.0
    %634 = vmatpush1.msra.mxu0 0.0
    %635 = vmatprep.subr.mxu0 0.0
    %636 = vmatpush1.msra.mxu0 0.0
    %637 = vmatprep.subr.mxu0 0.0
    %638 = vmatpush1.msra.mxu0 0.0
    %639 = vmatprep.subr.mxu0 0.0
    %640 = vmatpush1.msra.mxu0 0.0
    %641 = vmatprep.subr.mxu0 0.0
    %642 = vmatpush1.msra.mxu0 0.0
    %643 = vmatprep.subr.mxu0 0.0
    %644 = vmatpush1.msra.mxu0 %v540
    %645 = vmatprep.subr.mxu0 0.0
    %646 = vmatpush1.msra.mxu0 %v537
    %647 = vmatprep.subr.mxu0 0.0
    %648 = vmatpush2.msra.mxu0 0.0
    %649 = vmatprep.subr.mxu0 0.0
    %650 = vmatpush2.msra.mxu0 0.0
    %651 = vmatprep.subr.mxu0 0.0
    %652 = vmatpush2.msra.mxu0 0.0
    %653 = vmatprep.subr.mxu0 0.0
    %654 = vmatpush2.msra.mxu0 0.0
    %655 = vmatprep.subr.mxu0 0.0
    %656 = vmatpush2.msra.mxu0 0.0
    %657 = vmatprep.subr.mxu0 0.0
    %658 = vmatpush2.msra.mxu0 0.0
    %659 = vmatprep.subr.mxu0 0.0
    %660 = vmatpush2.msra.mxu0 0.0
    %661 = vmatprep.subr.mxu0 0.0
    %662 = vmatpush2.msra.mxu0 0.0
    %663 = vmatprep.subr.mxu0 0.0
    %664 = vmatpush2.msra.mxu0 0.0
    %665 = vmatprep.subr.mxu0 0.0
    %666 = vmatpush2.msra.mxu0 0.0
    %667 = vmatprep.subr.mxu0 0.0
    %668 = vmatpush2.msra.mxu0 0.0
    %669 = vmatprep.subr.mxu0 0.0
    %670 = vmatpush2.msra.mxu0 0.0
    %671 = vmatprep.subr.mxu0 0.0
    %672 = vmatpush2.msra.mxu0 0.0
    %673 = vmatprep.subr.mxu0 0.0
    %674 = vmatpush2.msra.mxu0 0.0
    %675 = vmatprep.subr.mxu0 0.0
    %676 = vmatpush2.msra.mxu0 0.0
    %677 = vmatprep.subr.mxu0 0.0
    %678 = vmatpush2.msra.mxu0 0.0
    %679 = vmatprep.mubr.f32.mxu0 0.0
    %680 = vmatmul.mubr.f32.gmra.mxu0 %v542
    %v681 = vpop.f32.mrf.mxu0
    %v682 = vadd.f32 0.0, %v681
    %v683 = vpop.f32.mrf.mxu0
    %684 = vdwg.mxu0
    %v685 = vadd.f32 %v529, %v611
    %v686 = vadd.f32 %v530, %v613
    %v687 = vadd.f32 %v531, %v682
    %v688 = vld [vmem:[%s2] sm:$0x7]
    %v690 = vlaneseq
    %v691 = vshrl.u32 %v690, 7
    %v692 = vsub.s32 0, %v691
    %v693 = vrot.slane %v688, %v692
    %v694 = vlaneseq
    %v695 = vshrl.u32 %v694, 7
    %v696 = vsub.s32 1, %v695
    %v697 = vrot.slane %v688, %v696
    %v698 = vlaneseq
    %v699 = vshrl.u32 %v698, 7
    %v700 = vsub.s32 2, %v699
    %v701 = vrot.slane %v688, %v700
    %v705 = vadd.f32 %v685, %v693
    %v706 = vadd.f32 %v686, %v697
    %v707 = vadd.f32 %v687, %v701
    %v708 = vmax.f32 %v705, 0.0
    %v709 = vmax.f32 %v706, 0.0
    %v710 = vmax.f32 %v707, 0.0
    %v711 = vld [vmem:[#allocation7] sm:$0xff]
    %v712 = vld [vmem:[#allocation7 + $0x8] sm:$0xff]
    %v713 = vld [vmem:[#allocation7 + $0x10] sm:$0xff]
    %v714 = vld [vmem:[#allocation7 + $0x18] sm:$0xff]
    %v715 = vld [vmem:[#allocation7 + $0x20] sm:$0xff]
    %v716 = vld [vmem:[#allocation7 + $0x28] sm:$0xff]
    %v717 = vld [vmem:[#allocation7 + $0x30] sm:$0xff]
    %v718 = vld [vmem:[#allocation7 + $0x38] sm:$0xff]
    %v719 = vld [vmem:[#allocation7 + $0x40] sm:$0xff]
    %v720 = vld [vmem:[#allocation7 + $0x48] sm:$0xff]
    %v721 = vld [vmem:[#allocation7 + $0x50] sm:$0xff]
    %v722 = vld [vmem:[#allocation7 + $0x58] sm:$0xff]
    %v723 = vld [vmem:[#allocation7 + $0x60] sm:$0xff]
    %v724 = vld [vmem:[#allocation7 + $0x68] sm:$0xff]
    %v725 = vld [vmem:[#allocation7 + $0x70] sm:$0xff]
    %v726 = vld [vmem:[#allocation7 + $0x78] sm:$0xff]
    %v727 = vld [vmem:[#allocation7 + $0x80] sm:$0xff]
    %v728 = vld [vmem:[#allocation7 + $0x88] sm:$0xff]
    %v729 = vld [vmem:[#allocation7 + $0x90] sm:$0xff]
    %v730 = vld [vmem:[#allocation7 + $0x98] sm:$0xff]
    %v731 = vld [vmem:[#allocation7 + $0xa0] sm:$0xff]
    %v732 = vld [vmem:[#allocation7 + $0xa8] sm:$0xff]
    %v733 = vld [vmem:[#allocation7 + $0xb0] sm:$0xff]
    %v734 = vld [vmem:[#allocation7 + $0xb8] sm:$0xff]
    %v735 = vld [vmem:[#allocation7 + $0xc0] sm:$0xff]
    %v736 = vld [vmem:[#allocation7 + $0xc8] sm:$0xff]
    %v737 = vld [vmem:[#allocation7 + $0xd0] sm:$0xff]
    %v738 = vld [vmem:[#allocation7 + $0xd8] sm:$0xff]
    %v739 = vld [vmem:[#allocation7 + $0xe0] sm:$0xff]
    %v740 = vld [vmem:[#allocation7 + $0xe8] sm:$0xff]
    %v741 = vld [vmem:[#allocation7 + $0xf0] sm:$0xff]
    %v742 = vld [vmem:[#allocation7 + $0xf8] sm:$0xff]
    %v743 = vld [vmem:[#allocation7 + $0x100] sm:$0xff]
    %v744 = vld [vmem:[#allocation7 + $0x108] sm:$0xff]
    %v745 = vld [vmem:[#allocation7 + $0x110] sm:$0xff]
    %v746 = vld [vmem:[#allocation7 + $0x118] sm:$0xff]
    %v747 = vld [vmem:[#allocation7 + $0x120] sm:$0xff]
    %v748 = vld [vmem:[#allocation7 + $0x128] sm:$0xff]
    %v749 = vld [vmem:[#allocation7 + $0x130] sm:$0xff]
    %v750 = vld [vmem:[#allocation7 + $0x138] sm:$0xff]
    %v751 = vld [vmem:[#allocation7 + $0x140] sm:$0xff]
    %v752 = vld [vmem:[#allocation7 + $0x148] sm:$0xff]
    %v753 = vld [vmem:[#allocation7 + $0x150] sm:$0xff]
    %v754 = vld [vmem:[#allocation7 + $0x158] sm:$0xff]
    %v755 = vld [vmem:[#allocation7 + $0x160] sm:$0xff]
    %v756 = vld [vmem:[#allocation7 + $0x168] sm:$0xff]
    %v757 = vld [vmem:[#allocation7 + $0x170] sm:$0xff]
    %v758 = vld [vmem:[#allocation7 + $0x178] sm:$0xff]
    %759 = vmatprep.subr.mxu0 0.0
    %760 = vmatpush1.msra.mxu0 %v726
    %761 = vmatprep.subr.mxu0 0.0
    %762 = vmatpush1.msra.mxu0 %v725
    %763 = vmatprep.subr.mxu0 0.0
    %764 = vmatpush1.msra.mxu0 %v724
    %765 = vmatprep.subr.mxu0 0.0
    %766 = vmatpush1.msra.mxu0 %v723
    %767 = vmatprep.subr.mxu0 0.0
    %768 = vmatpush1.msra.mxu0 %v722
    %769 = vmatprep.subr.mxu0 0.0
    %770 = vmatpush1.msra.mxu0 %v721
    %771 = vmatprep.subr.mxu0 0.0
    %772 = vmatpush1.msra.mxu0 %v720
    %773 = vmatprep.subr.mxu0 0.0
    %774 = vmatpush1.msra.mxu0 %v719
    %775 = vmatprep.subr.mxu0 0.0
    %776 = vmatpush1.msra.mxu0 %v718
    %777 = vmatprep.subr.mxu0 0.0
    %778 = vmatpush1.msra.mxu0 %v717
    %779 = vmatprep.subr.mxu0 0.0
    %780 = vmatpush1.msra.mxu0 %v716
    %781 = vmatprep.subr.mxu0 0.0
    %782 = vmatpush1.msra.mxu0 %v715
    %783 = vmatprep.subr.mxu0 0.0
    %784 = vmatpush1.msra.mxu0 %v714
    %785 = vmatprep.subr.mxu0 0.0
    %786 = vmatpush1.msra.mxu0 %v713
    %787 = vmatprep.subr.mxu0 0.0
    %788 = vmatpush1.msra.mxu0 %v712
    %789 = vmatprep.subr.mxu0 0.0
    %790 = vmatpush1.msra.mxu0 %v711
    %791 = vmatprep.subr.mxu0 0.0
    %792 = vmatpush2.msra.mxu0 %v742
    %793 = vmatprep.subr.mxu0 0.0
    %794 = vmatpush2.msra.mxu0 %v741
    %795 = vmatprep.subr.mxu0 0.0
    %796 = vmatpush2.msra.mxu0 %v740
    %797 = vmatprep.subr.mxu0 0.0
    %798 = vmatpush2.msra.mxu0 %v739
    %799 = vmatprep.subr.mxu0 0.0
    %800 = vmatpush2.msra.mxu0 %v738
    %801 = vmatprep.subr.mxu0 0.0
    %802 = vmatpush2.msra.mxu0 %v737
    %803 = vmatprep.subr.mxu0 0.0
    %804 = vmatpush2.msra.mxu0 %v736
    %805 = vmatprep.subr.mxu0 0.0
    %806 = vmatpush2.msra.mxu0 %v735
    %807 = vmatprep.subr.mxu0 0.0
    %808 = vmatpush2.msra.mxu0 %v734
    %809 = vmatprep.subr.mxu0 0.0
    %810 = vmatpush2.msra.mxu0 %v733
    %811 = vmatprep.subr.mxu0 0.0
    %812 = vmatpush2.msra.mxu0 %v732
    %813 = vmatprep.subr.mxu0 0.0
    %814 = vmatpush2.msra.mxu0 %v731
    %815 = vmatprep.subr.mxu0 0.0
    %816 = vmatpush2.msra.mxu0 %v730
    %817 = vmatprep.subr.mxu0 0.0
    %818 = vmatpush2.msra.mxu0 %v729
    %819 = vmatprep.subr.mxu0 0.0
    %820 = vmatpush2.msra.mxu0 %v728
    %821 = vmatprep.subr.mxu0 0.0
    %822 = vmatpush2.msra.mxu0 %v727
    %823 = vmatprep.mubr.f32.mxu0 %v709
    %824 = vmatmul.mubr.f32.gmra.mxu0 %v708
    %v825 = vpop.f32.mrf.mxu0
    %v826 = vadd.f32 0.0, %v825
    %v827 = vpop.f32.mrf.mxu0
    %828 = vdwg.mxu0
    %829 = vmatprep.subr.mxu0 0.0
    %830 = vmatpush1.msra.mxu0 %v758
    %831 = vmatprep.subr.mxu0 0.0
    %832 = vmatpush1.msra.mxu0 %v757
    %833 = vmatprep.subr.mxu0 0.0
    %834 = vmatpush1.msra.mxu0 %v756
    %835 = vmatprep.subr.mxu0 0.0
    %836 = vmatpush1.msra.mxu0 %v755
    %837 = vmatprep.subr.mxu0 0.0
    %838 = vmatpush1.msra.mxu0 %v754
    %839 = vmatprep.subr.mxu0 0.0
    %840 = vmatpush1.msra.mxu0 %v753
    %841 = vmatprep.subr.mxu0 0.0
    %842 = vmatpush1.msra.mxu0 %v752
    %843 = vmatprep.subr.mxu0 0.0
    %844 = vmatpush1.msra.mxu0 %v751
    %845 = vmatprep.subr.mxu0 0.0
    %846 = vmatpush1.msra.mxu0 %v750
    %847 = vmatprep.subr.mxu0 0.0
    %848 = vmatpush1.msra.mxu0 %v749
    %849 = vmatprep.subr.mxu0 0.0
    %850 = vmatpush1.msra.mxu0 %v748
    %851 = vmatprep.subr.mxu0 0.0
    %852 = vmatpush1.msra.mxu0 %v747
    %853 = vmatprep.subr.mxu0 0.0
    %854 = vmatpush1.msra.mxu0 %v746
    %855 = vmatprep.subr.mxu0 0.0
    %856 = vmatpush1.msra.mxu0 %v745
    %857 = vmatprep.subr.mxu0 0.0
    %858 = vmatpush1.msra.mxu0 %v744
    %859 = vmatprep.subr.mxu0 0.0
    %860 = vmatpush1.msra.mxu0 %v743
    %861 = vmatprep.subr.mxu0 0.0
    %862 = vmatpush2.msra.mxu0 0.0
    %863 = vmatprep.subr.mxu0 0.0
    %864 = vmatpush2.msra.mxu0 0.0
    %865 = vmatprep.subr.mxu0 0.0
    %866 = vmatpush2.msra.mxu0 0.0
    %867 = vmatprep.subr.mxu0 0.0
    %868 = vmatpush2.msra.mxu0 0.0
    %869 = vmatprep.subr.mxu0 0.0
    %870 = vmatpush2.msra.mxu0 0.0
    %871 = vmatprep.subr.mxu0 0.0
    %872 = vmatpush2.msra.mxu0 0.0
    %873 = vmatprep.subr.mxu0 0.0
    %874 = vmatpush2.msra.mxu0 0.0
    %875 = vmatprep.subr.mxu0 0.0
    %876 = vmatpush2.msra.mxu0 0.0
    %877 = vmatprep.subr.mxu0 0.0
    %878 = vmatpush2.msra.mxu0 0.0
    %879 = vmatprep.subr.mxu0 0.0
    %880 = vmatpush2.msra.mxu0 0.0
    %881 = vmatprep.subr.mxu0 0.0
    %882 = vmatpush2.msra.mxu0 0.0
    %883 = vmatprep.subr.mxu0 0.0
    %884 = vmatpush2.msra.mxu0 0.0
    %885 = vmatprep.subr.mxu0 0.0
    %886 = vmatpush2.msra.mxu0 0.0
    %887 = vmatprep.subr.mxu0 0.0
    %888 = vmatpush2.msra.mxu0 0.0
    %889 = vmatprep.subr.mxu0 0.0
    %890 = vmatpush2.msra.mxu0 0.0
    %891 = vmatprep.subr.mxu0 0.0
    %892 = vmatpush2.msra.mxu0 0.0
    %893 = vmatprep.mubr.f32.mxu0 0.0
    %894 = vmatmul.mubr.f32.gmra.mxu0 %v710
    %v895 = vpop.f32.mrf.mxu0
    %v896 = vadd.f32 %v826, %v895
    %v897 = vpop.f32.mrf.mxu0
    %898 = vdwg.mxu0
    %v899 = vld [vmem:[%s4] sm:$0xff]
    %v900 = vld [vmem:[%s4 + $0x8] sm:$0xff]
    %v901 = vld [vmem:[%s4 + $0x10] sm:$0xff]
    %v902 = vld [vmem:[%s4 + $0x18] sm:$0xff]
    %v903 = vld [vmem:[%s4 + $0x20] sm:$0xff]
    %v904 = vld [vmem:[%s4 + $0x28] sm:$0xff]
    %v905 = vld [vmem:[%s4 + $0x30] sm:$0xff]
    %v906 = vld [vmem:[%s4 + $0x38] sm:$0xff]
    %v907 = vld [vmem:[%s4 + $0x40] sm:$0xff]
    %v908 = vld [vmem:[%s4 + $0x48] sm:$0xff]
    %v909 = vld [vmem:[%s4 + $0x50] sm:$0xff]
    %v910 = vld [vmem:[%s4 + $0x58] sm:$0xff]
    %v911 = vld [vmem:[%s4 + $0x60] sm:$0xff]
    %v912 = vld [vmem:[%s4 + $0x68] sm:$0xff]
    %v913 = vld [vmem:[%s4 + $0x70] sm:$0xff]
    %v914 = vld [vmem:[%s4 + $0x78] sm:$0xff]
    %915 = vmatprep.subr.mxu0 0.0
    %916 = vmatpush1.msra.mxu0 %v914
    %917 = vmatprep.subr.mxu0 0.0
    %918 = vmatpush1.msra.mxu0 %v913
    %919 = vmatprep.subr.mxu0 0.0
    %920 = vmatpush1.msra.mxu0 %v912
    %921 = vmatprep.subr.mxu0 0.0
    %922 = vmatpush1.msra.mxu0 %v911
    %923 = vmatprep.subr.mxu0 0.0
    %924 = vmatpush1.msra.mxu0 %v910
    %925 = vmatprep.subr.mxu0 0.0
    %926 = vmatpush1.msra.mxu0 %v909
    %927 = vmatprep.subr.mxu0 0.0
    %928 = vmatpush1.msra.mxu0 %v908
    %929 = vmatprep.subr.mxu0 0.0
    %930 = vmatpush1.msra.mxu0 %v907
    %931 = vmatprep.subr.mxu0 0.0
    %932 = vmatpush1.msra.mxu0 %v906
    %933 = vmatprep.subr.mxu0 0.0
    %934 = vmatpush1.msra.mxu0 %v905
    %935 = vmatprep.subr.mxu0 0.0
    %936 = vmatpush1.msra.mxu0 %v904
    %937 = vmatprep.subr.mxu0 0.0
    %938 = vmatpush1.msra.mxu0 %v903
    %939 = vmatprep.subr.mxu0 0.0
    %940 = vmatpush1.msra.mxu0 %v902
    %941 = vmatprep.subr.mxu0 0.0
    %942 = vmatpush1.msra.mxu0 %v901
    %943 = vmatprep.subr.mxu0 0.0
    %944 = vmatpush1.msra.mxu0 %v900
    %945 = vmatprep.subr.mxu0 0.0
    %946 = vmatpush1.msra.mxu0 %v899
    %947 = vmatprep.subr.mxu0 0.0
    %948 = vmatpush2.msra.mxu0 0.0
    %949 = vmatprep.subr.mxu0 0.0
    %950 = vmatpush2.msra.mxu0 0.0
    %951 = vmatprep.subr.mxu0 0.0
    %952 = vmatpush2.msra.mxu0 0.0
    %953 = vmatprep.subr.mxu0 0.0
    %954 = vmatpush2.msra.mxu0 0.0
    %955 = vmatprep.subr.mxu0 0.0
    %956 = vmatpush2.msra.mxu0 0.0
    %957 = vmatprep.subr.mxu0 0.0
    %958 = vmatpush2.msra.mxu0 0.0
    %959 = vmatprep.subr.mxu0 0.0
    %960 = vmatpush2.msra.mxu0 0.0
    %961 = vmatprep.subr.mxu0 0.0
    %962 = vmatpush2.msra.mxu0 0.0
    %963 = vmatprep.subr.mxu0 0.0
    %964 = vmatpush2.msra.mxu0 0.0
    %965 = vmatprep.subr.mxu0 0.0
    %966 = vmatpush2.msra.mxu0 0.0
    %967 = vmatprep.subr.mxu0 0.0
    %968 = vmatpush2.msra.mxu0 0.0
    %969 = vmatprep.subr.mxu0 0.0
    %970 = vmatpush2.msra.mxu0 0.0
    %971 = vmatprep.subr.mxu0 0.0
    %972 = vmatpush2.msra.mxu0 0.0
    %973 = vmatprep.subr.mxu0 0.0
    %974 = vmatpush2.msra.mxu0 0.0
    %975 = vmatprep.subr.mxu0 0.0
    %976 = vmatpush2.msra.mxu0 0.0
    %977 = vmatprep.subr.mxu0 0.0
    %978 = vmatpush2.msra.mxu0 0.0
    %979 = vmatprep.mubr.f32.mxu0 0.0
    %980 = vmatmul.mubr.f32.gmra.mxu0 %v896
    %v981 = vpop.f32.mrf.mxu0
    %v982 = vadd.f32 0.0, %v981
    %v983 = vpop.f32.mrf.mxu0
    %984 = vdwg.mxu0
    %v985 = vxor.u32 %v982, 2147483648
    %v986 = vmul.f32 %v985, 1.442695
    %v987 = vpow.pop %v986
    %v988 = vadd.f32 %v987, 1.0
    %v989 = vrcp.pop %v988
    %v990 = vmul.f32 1.0, %v989
    %v991 = vld [vmem:[%s5] sm:$0x1]
    %v993 = vlaneseq
    %v994 = vshrl.u32 %v993, 7
    %v995 = vsub.s32 0, %v994
    %v996 = vrot.slane %v991, %v995
    %v998 = vmul.f32 %v990, %v996
    %v999 = vld [vmem:[%s6] sm:$0x1]
    %v1001 = vlaneseq
    %v1002 = vshrl.u32 %v1001, 7
    %v1003 = vsub.s32 0, %v1002
    %v1004 = vrot.slane %v999, %v1003
    %v1006 = vadd.f32 %v998, %v1004
    %v1007 = vmul.f32 %v1006, %v896
    %v1008 = vld [vmem:[%s7] sm:$0xff]
    %v1009 = vld [vmem:[%s7 + $0x8] sm:$0xff]
    %v1010 = vld [vmem:[%s7 + $0x10] sm:$0xff]
    %v1011 = vld [vmem:[%s7 + $0x18] sm:$0xff]
    %v1012 = vld [vmem:[%s7 + $0x20] sm:$0xff]
    %v1013 = vld [vmem:[%s7 + $0x28] sm:$0xff]
    %v1014 = vld [vmem:[%s7 + $0x30] sm:$0xff]
    %v1015 = vld [vmem:[%s7 + $0x38] sm:$0xff]
    %v1016 = vld [vmem:[%s7 + $0x40] sm:$0xff]
    %v1017 = vld [vmem:[%s7 + $0x48] sm:$0xff]
    %v1018 = vld [vmem:[%s7 + $0x50] sm:$0xff]
    %v1019 = vld [vmem:[%s7 + $0x58] sm:$0xff]
    %v1020 = vld [vmem:[%s7 + $0x60] sm:$0xff]
    %v1021 = vld [vmem:[%s7 + $0x68] sm:$0xff]
    %v1022 = vld [vmem:[%s7 + $0x70] sm:$0xff]
    %v1023 = vld [vmem:[%s7 + $0x78] sm:$0xff]
    %1024 = vmatprep.subr.mxu0 0.0
    %1025 = vmatpush1.msra.mxu0 %v1023
    %1026 = vmatprep.subr.mxu0 0.0
    %1027 = vmatpush1.msra.mxu0 %v1022
    %1028 = vmatprep.subr.mxu0 0.0
    %1029 = vmatpush1.msra.mxu0 %v1021
    %1030 = vmatprep.subr.mxu0 0.0
    %1031 = vmatpush1.msra.mxu0 %v1020
    %1032 = vmatprep.subr.mxu0 0.0
    %1033 = vmatpush1.msra.mxu0 %v1019
    %1034 = vmatprep.subr.mxu0 0.0
    %1035 = vmatpush1.msra.mxu0 %v1018
    %1036 = vmatprep.subr.mxu0 0.0
    %1037 = vmatpush1.msra.mxu0 %v1017
    %1038 = vmatprep.subr.mxu0 0.0
    %1039 = vmatpush1.msra.mxu0 %v1016
    %1040 = vmatprep.subr.mxu0 0.0
    %1041 = vmatpush1.msra.mxu0 %v1015
    %1042 = vmatprep.subr.mxu0 0.0
    %1043 = vmatpush1.msra.mxu0 %v1014
    %1044 = vmatprep.subr.mxu0 0.0
    %1045 = vmatpush1.msra.mxu0 %v1013
    %1046 = vmatprep.subr.mxu0 0.0
    %1047 = vmatpush1.msra.mxu0 %v1012
    %1048 = vmatprep.subr.mxu0 0.0
    %1049 = vmatpush1.msra.mxu0 %v1011
    %1050 = vmatprep.subr.mxu0 0.0
    %1051 = vmatpush1.msra.mxu0 %v1010
    %1052 = vmatprep.subr.mxu0 0.0
    %1053 = vmatpush1.msra.mxu0 %v1009
    %1054 = vmatprep.subr.mxu0 0.0
    %1055 = vmatpush1.msra.mxu0 %v1008
    %1056 = vmatprep.subr.mxu0 0.0
    %1057 = vmatpush2.msra.mxu0 0.0
    %1058 = vmatprep.subr.mxu0 0.0
    %1059 = vmatpush2.msra.mxu0 0.0
    %1060 = vmatprep.subr.mxu0 0.0
    %1061 = vmatpush2.msra.mxu0 0.0
    %1062 = vmatprep.subr.mxu0 0.0
    %1063 = vmatpush2.msra.mxu0 0.0
    %1064 = vmatprep.subr.mxu0 0.0
    %1065 = vmatpush2.msra.mxu0 0.0
    %1066 = vmatprep.subr.mxu0 0.0
    %1067 = vmatpush2.msra.mxu0 0.0
    %1068 = vmatprep.subr.mxu0 0.0
    %1069 = vmatpush2.msra.mxu0 0.0
    %1070 = vmatprep.subr.mxu0 0.0
    %1071 = vmatpush2.msra.mxu0 0.0
    %1072 = vmatprep.subr.mxu0 0.0
    %1073 = vmatpush2.msra.mxu0 0.0
    %1074 = vmatprep.subr.mxu0 0.0
    %1075 = vmatpush2.msra.mxu0 0.0
    %1076 = vmatprep.subr.mxu0 0.0
    %1077 = vmatpush2.msra.mxu0 0.0
    %1078 = vmatprep.subr.mxu0 0.0
    %1079 = vmatpush2.msra.mxu0 0.0
    %1080 = vmatprep.subr.mxu0 0.0
    %1081 = vmatpush2.msra.mxu0 0.0
    %1082 = vmatprep.subr.mxu0 0.0
    %1083 = vmatpush2.msra.mxu0 0.0
    %1084 = vmatprep.subr.mxu0 0.0
    %1085 = vmatpush2.msra.mxu0 0.0
    %1086 = vmatprep.subr.mxu0 0.0
    %1087 = vmatpush2.msra.mxu0 0.0
    %1088 = vmatprep.mubr.f32.mxu0 0.0
    %1089 = vmatmul.mubr.f32.gmra.mxu0 %v1007
    %v1090 = vpop.f32.mrf.mxu0
    %v1091 = vadd.f32 0.0, %v1090
    %v1092 = vpop.f32.mrf.mxu0
    %1093 = vdwg.mxu0
    %vm1094 = vcmask 64512
    %1095 = vst.msk [vmem:[#allocation8] sm:$0xff] %vm1094, %v1091
    // Predicated region
    $region46: #{tpu_custom_call.1} parent=1 // pred_check
      _
    $region47: #{tpu_custom_call.1} parent=1 // pred_check_branch
      %1097 = sbr.rel (0) target = $region49
    $region48: #{tpu_custom_call.1} parent=1 // pred_region
      %s1099 = ssub.s32 128, 128
      %1100 = vsyncadd [#allocation4], %s1099
      %s1102 = sshll.u32 [#allocation8], 4
      %s1103 = int_to_ptr.vmem [resolvable:$true] %s1102
      %1105 = dma.vmem_to_hbm [thread:$0]  %s1103, 128, %s8, [#allocation4]
    $region49: #{tpu_custom_call.1} parent=1 // pred_fallthru
      _
    // Predicated region
    $region50: #{tpu_custom_call.1} parent=1 // pred_check
      _
    $region51: #{tpu_custom_call.1} parent=1 // pred_check_branch
      %1107 = sbr.rel (0) target = $region53
    $region52: #{tpu_custom_call.1} parent=1 // pred_region
      %1108 = dma.done [#allocation4], 128
    $region53: #{tpu_custom_call.1} parent=1 // pred_fallthru
      _
    %1109 = vsyncpa [#allocation3], 1
    %1110 = vsyncpa [#allocation6], 1
    %1111 = vsyncpa [#allocation4], 1

</llo_original>
